<compile_context>
chip_gen: v5e
topology: v5e:2x2
jax: 0.10.0
libtpu: 0.0.40
codegen_flags: <defaults>
</compile_context>

<pallas_src>
import functools

import jax
import jax.numpy as jnp
from jax.experimental import pallas as pl
from jax.experimental.pallas import tpu as pltpu

_SMOOTH = 1e-06
_LANE = 128
_SUB = 8


def _wce_block_kernel(yt_ref, yp_ref, out_ref, *, alpha, valid_rows, block_rows):
    """Fused weighted-CE math + vreg-shaped partial sum over one (block_rows, B) block.

    valid_rows / block_rows are static Python ints; the ragged final block (if any)
    masks yt/yp to 0 before the logs so OOB garbage can never produce a NaN.
    """
    i = pl.program_id(0)
    cols = yt_ref.shape[1]

    def compute(mask_tail):
        yt = yt_ref[...]                      # (block_rows, cols) pooled targets
        yp = yp_ref[...]                      # (block_rows, cols) predictions
        if mask_tail:
            row = jax.lax.broadcasted_iota(jnp.int32, (block_rows, cols), 0)
            valid = (i * block_rows + row) < valid_rows
            # Mask BEFORE the logs: yt = yp = 0 -> w = 0 -> a = 0, log args stay positive.
            yt = jnp.where(valid, yt, 0.0)
            yp = jnp.where(valid, yp, 0.0)

        w = yt - yp
        a = (w * w) * (
            alpha * yt * jnp.log(yp + _SMOOTH)
            + (2.0 - alpha) * (1.0 - yt) * jnp.log(1.0 - yp + _SMOOTH)
        )

        # Keep the partial reduction vreg-shaped: splitting the leading axis on an
        # 8-row boundary is a free regroup; summing axis 0 is pure VPU adds (no XLU
        # cross-lane reduce per grid step).
        partial = jnp.sum(a.reshape(block_rows // _SUB, _SUB, cols), axis=0)  # (8, cols)
        out_ref[...] = partial[None, :, :]

    if valid_rows % block_rows == 0:
        # Every block is fully valid: no masking anywhere.
        compute(False)
    else:
        last = pl.num_programs(0) - 1

        @pl.when(i == last)
        def _():
            compute(True)

        @pl.when(i != last)
        def _():
            compute(False)


def _choose_cols(m):
    """Column count B for the flat (A, B) view with A*B == m exactly (no pad copy)."""
    if m % _LANE == 0 and m // _LANE >= _SUB:
        return _LANE                          # lane-dense, full (8,128) vregs
    # Fallback for awkward element counts: largest divisor that still leaves >= 8 rows.
    cap = max(1, min(m // _SUB, _LANE))
    for d in range(cap, 0, -1):
        if m % d == 0:
            return d
    return 1


def _hw_params():
    """Device-dependent knobs (safe fallbacks everywhere)."""
    kind = ""
    try:
        kind = getattr(jax.devices()[0], "device_kind", "").lower()
    except Exception:
        pass
    vmem_limit = 32 * 1024 * 1024             # raises v5e's 16 MiB scoped default
    try:
        vmem_limit = min(vmem_limit, int(pltpu.get_tpu_info().vmem_capacity_bytes))
    except Exception:
        pass
    # 4096 rows x 128 lanes x f32 = 2 MiB per input block; double-buffered x 2 inputs
    # plus elementwise temporaries stays comfortably inside a 32 MiB scoped limit.
    rows_cap = 4096 if vmem_limit >= 32 * 1024 * 1024 else 2048
    is_v7 = "v7" in kind
    return rows_cap, vmem_limit, is_v7


def w_crossentry(y_true, y_pred, alpha=1.8):
    """y_true: (N, C, Dt, Ht, Wt) f32; y_pred: (N, C, Dp, Hp, Wp) f32. Returns scalar f32."""
    y_true = y_true.astype(jnp.float32)
    y_pred = y_pred.astype(jnp.float32)

    size = y_true.shape[-1] // y_pred.shape[-1]
    N, C, Dp, Hp, Wp = y_pred.shape
    M = N * C * Dp * Hp * Wp

    # max_pool3d(kernel=stride=size) as one XLA reduce fusion over the window axes of a
    # free reshape: reads y_true exactly once, writes only the pooled tensor, already in
    # the row-major order the flat kernel view consumes.
    if size == 1:
        yt = y_true
    else:
        yt = y_true.reshape(N, C, Dp, size, Hp, size, Wp, size).max(axis=(3, 5, 7))

    # Free (bitcast) 2-D views — NO padding copies of either M-element stream.
    B = _choose_cols(M)
    A = M // B
    yt2 = yt.reshape(A, B)
    yp2 = y_pred.reshape(A, B)

    if A < _SUB:
        # Degenerate tiny input: pad to 8 rows (negligible copy; zero rows contribute 0).
        pad = _SUB - A
        yt2 = jnp.pad(yt2, ((0, pad), (0, 0)))
        yp2 = jnp.pad(yp2, ((0, pad), (0, 0)))
        A = _SUB

    rows_cap, vmem_limit, is_v7 = _hw_params()
    TA = min(rows_cap, (A // _SUB) * _SUB)    # multiple of 8, never exceeds A
    G = pl.cdiv(A, TA)

    kernel = functools.partial(
        _wce_block_kernel, alpha=float(alpha), valid_rows=A, block_rows=TA
    )

    # v7x-only knobs: shard the grid across both TensorCores and deepen the input
    # pipeline; single-TC v5e/v6e keep the validated defaults.
    use_core_parallel = is_v7 and G >= 2
    semantics = (pltpu.CORE_PARALLEL,) if use_core_parallel else ("parallel",)
    spec_kw = dict(pipeline_mode=pl.Buffered(3)) if is_v7 else {}

    partials = pl.pallas_call(
        kernel,
        out_shape=jax.ShapeDtypeStruct((G, _SUB, B), jnp.float32),
        grid_spec=pltpu.PrefetchScalarGridSpec(
            num_scalar_prefetch=0,
            grid=(G,),
            in_specs=[
                pl.BlockSpec((TA, B), lambda i: (i, 0), **spec_kw),
                pl.BlockSpec((TA, B), lambda i: (i, 0), **spec_kw),
            ],
            out_specs=pl.BlockSpec((1, _SUB, B), lambda i: (i, 0, 0)),
        ),
        compiler_params=pltpu.CompilerParams(
            dimension_semantics=semantics,
            vmem_limit_bytes=vmem_limit,
        ),
    )(yt2, yp2)

    # Tiny final reduction + scale; divide by the true element count.
    return -(jnp.sum(partials) / jnp.float32(M))


def _reference(y_true, y_pred, alpha=1.8):
    """Pure-JAX reference mirroring the PyTorch code."""
    size = y_true.shape[-1] // y_pred.shape[-1]
    N, C, Dp, Hp, Wp = y_pred.shape
    yt = y_true.reshape(N, C, Dp, size, Hp, size, Wp, size).max(axis=(3, 5, 7))
    w = yt - y_pred
    a = (w ** 2) * (
        alpha * yt * jnp.log(y_pred + _SMOOTH)
        + (2.0 - alpha) * (1.0 - yt) * jnp.log(1.0 - y_pred + _SMOOTH)
    )
    return -jnp.mean(a)


if __name__ == "__main__":
    key = jax.random.PRNGKey(0)
    k1, k2 = jax.random.split(key)

    # Small shapes consistent with the module: y_true spatial = 2x y_pred spatial -> size = 2.
    N, C = 2, 4
    y_true = (jax.random.uniform(k1, (N, C, 16, 16, 16), jnp.float32) > 0.5).astype(jnp.float32)
    y_pred = jax.random.uniform(k2, (N, C, 8, 8, 8), jnp.float32, minval=0.01, maxval=0.99)

    # jit the whole loss so the wrapper reshapes stay bitcasts and the pool fuses.
    loss_fn = jax.jit(functools.partial(w_crossentry, alpha=1.8))
    loss = jax.block_until_ready(loss_fn(y_true, y_pred))
    ref = jax.block_until_ready(_reference(y_true, y_pred, alpha=1.8))

    assert jnp.isfinite(loss), "kernel produced non-finite loss"
    assert abs(float(loss) - float(ref)) < 1e-5, (float(loss), float(ref))
    print("KERNEL_OK")
</pallas_src>

<mosaic_0001>
module attributes {stable_mosaic.version = 11 : i64} {
  func.func @_wce_block_kernel(%arg0: i32, %arg1: memref<32x128xf32, #tpu.memory_space<vmem>>, %arg2: memref<32x128xf32, #tpu.memory_space<vmem>>, %arg3: memref<1x8x128xf32, #tpu.memory_space<vmem>>) attributes {dimension_semantics = [#tpu.dimension_semantics<parallel>], iteration_bounds = array<i64: 1>, scalar_prefetch = 0 : i64, scratch_operands = 0 : i64, tpu.core_type = #tpu.core_type<tc>, window_params = [{transform_indices = @transform_0, window_bounds = array<i64: 32, 128>}, {transform_indices = @transform_1, window_bounds = array<i64: 32, 128>}, {transform_indices = @transform_2, window_bounds = array<i64: 1, 8, 128>}]} {
    %c0 = arith.constant 0 : index
    %c0_0 = arith.constant 0 : index
    %0 = vector.load %arg1[%c0, %c0_0] : memref<32x128xf32, #tpu.memory_space<vmem>>, vector<32x128xf32>
    %c0_1 = arith.constant 0 : index
    %c0_2 = arith.constant 0 : index
    %1 = vector.load %arg2[%c0_1, %c0_2] : memref<32x128xf32, #tpu.memory_space<vmem>>, vector<32x128xf32>
    %2 = arith.subf %0, %1 : vector<32x128xf32>
    %3 = arith.mulf %2, %2 : vector<32x128xf32>
    %cst = arith.constant 1.800000e+00 : f32
    %4 = vector.broadcast %cst : f32 to vector<32x128xf32>
    %5 = arith.mulf %4, %0 : vector<32x128xf32>
    %cst_3 = arith.constant 9.99999997E-7 : f32
    %6 = vector.broadcast %cst_3 : f32 to vector<32x128xf32>
    %7 = arith.addf %1, %6 : vector<32x128xf32>
    %8 = math.log %7 : vector<32x128xf32>
    %9 = arith.mulf %5, %8 : vector<32x128xf32>
    %cst_4 = arith.constant 1.000000e+00 : f32
    %10 = vector.broadcast %cst_4 : f32 to vector<32x128xf32>
    %11 = arith.subf %10, %0 : vector<32x128xf32>
    %cst_5 = arith.constant 2.000000e-01 : f32
    %12 = vector.broadcast %cst_5 : f32 to vector<32x128xf32>
    %13 = arith.mulf %12, %11 : vector<32x128xf32>
    %cst_6 = arith.constant 1.000000e+00 : f32
    %14 = vector.broadcast %cst_6 : f32 to vector<32x128xf32>
    %15 = arith.subf %14, %1 : vector<32x128xf32>
    %cst_7 = arith.constant 9.99999997E-7 : f32
    %16 = vector.broadcast %cst_7 : f32 to vector<32x128xf32>
    %17 = arith.addf %15, %16 : vector<32x128xf32>
    %18 = math.log %17 : vector<32x128xf32>
    %19 = arith.mulf %13, %18 : vector<32x128xf32>
    %20 = arith.addf %9, %19 : vector<32x128xf32>
    %21 = arith.mulf %3, %20 : vector<32x128xf32>
    %22 = vector.shape_cast %21 : vector<32x128xf32> to vector<4x8x128xf32>
    %cst_8 = arith.constant dense<0.000000e+00> : vector<8x128xf32>
    %23 = vector.multi_reduction <add>, %22, %cst_8 [0] : vector<4x8x128xf32> to vector<8x128xf32>
    %24 = vector.shape_cast %23 : vector<8x128xf32> to vector<1x8x128xf32>
    %c0_9 = arith.constant 0 : index
    %c0_10 = arith.constant 0 : index
    %c0_11 = arith.constant 0 : index
    %25 = vector.load %arg3[%c0_9, %c0_10, %c0_11] : memref<1x8x128xf32, #tpu.memory_space<vmem>>, vector<1x8x128xf32>
    tpu.vector_store %arg3[%c0_9, %c0_10, %c0_11], %24 {strides = array<i32>} : memref<1x8x128xf32, #tpu.memory_space<vmem>>, vector<1x8x128xf32>,
    return
  }
  func.func @transform_0(%arg0: i32) -> (i32, i32) {
    %c0_i32 = arith.constant 0 : i32
    %c0_i32_0 = arith.constant 0 : i32
    return %arg0, %c0_i32 : i32, i32
  }
  func.func @transform_1(%arg0: i32) -> (i32, i32) {
    %c0_i32 = arith.constant 0 : i32
    %c0_i32_0 = arith.constant 0 : i32
    return %arg0, %c0_i32 : i32, i32
  }
  func.func @transform_2(%arg0: i32) -> (i32, i32, i32) {
    %c0_i32 = arith.constant 0 : i32
    %c0_i32_0 = arith.constant 0 : i32
    %c0_i32_1 = arith.constant 0 : i32
    return %arg0, %c0_i32, %c0_i32_0 : i32, i32, i32
  }
}

</mosaic_0001>

<llo_original>
// kernel: w_crossentry.1
$region0: #{w_crossentry.1}
  #allocation0 [shape = 'u32[]', space=smem, size = 0x4, offset = 0x4, fixed_abs, tag = 'smem constant byte address 0x4 - core index']
  #allocation1 [shape = 'u32[72,128]{1,0:T(1,128)}', space=vmem, size = 0x9000, scoped, tag = 'internal scratch']
  %s0 = inlined_call_operand.vmem [shape: f32[32,128], index: 0, kind: input, shape index: {}]
  %s1 = inlined_call_operand.vmem [shape: f32[32,128], index: 1, kind: input, shape index: {}]
  %s2 = inlined_call_operand.vmem [shape: f32[1,8,128], index: 2, kind: output, shape index: {}]
  %s3 = sld [smem:[#allocation0]]
  $region18: #{w_crossentry.1} parent=0
    _
  %s5 = ssub.s32 1, %s3
  %s6 = scalar_select 0, %s5, %s3
  // Predicated region
  $region2: #{w_crossentry.1} parent=0 // pred_check
    _
  $region3: #{w_crossentry.1} parent=0 // pred_check_branch
    %8 = sbr.rel (0) target = $region5
  $region4: #{w_crossentry.1} parent=0 // pred_region
    _
  $region5: #{w_crossentry.1} parent=0 // pred_fallthru
    _
  // Predicated region
  $region6: #{w_crossentry.1} parent=0 // pred_check
    _
  $region7: #{w_crossentry.1} parent=0 // pred_check_branch
    %10 = sbr.rel (0) target = $region9
  $region8: #{w_crossentry.1} parent=0 // pred_region
    _
  $region9: #{w_crossentry.1} parent=0 // pred_fallthru
    _
  %v11 = vld [vmem:[%s0] sm:$0xff]
  %v12 = vld [vmem:[%s0 + $0x8] sm:$0xff]
  %v13 = vld [vmem:[%s0 + $0x10] sm:$0xff]
  %v14 = vld [vmem:[%s0 + $0x18] sm:$0xff]
  %v15 = vld [vmem:[%s1] sm:$0xff]
  %v16 = vld [vmem:[%s1 + $0x8] sm:$0xff]
  %v17 = vld [vmem:[%s1 + $0x10] sm:$0xff]
  %v18 = vld [vmem:[%s1 + $0x18] sm:$0xff]
  %v19 = vsub.f32 %v11, %v15
  %v20 = vsub.f32 %v12, %v16
  %v21 = vsub.f32 %v13, %v17
  %v22 = vsub.f32 %v14, %v18
  %v23 = vmul.f32 %v19, %v19
  %v24 = vmul.f32 %v20, %v20
  %v25 = vmul.f32 %v21, %v21
  %v26 = vmul.f32 %v22, %v22
  %v27 = vmul.f32 %v11, 1.8
  %v28 = vmul.f32 %v12, 1.8
  %v29 = vmul.f32 %v13, 1.8
  %v30 = vmul.f32 %v14, 1.8
  %v31 = vadd.f32 %v15, 1e-06
  %v32 = vadd.f32 %v16, 1e-06
  %v33 = vadd.f32 %v17, 1e-06
  %v34 = vadd.f32 %v18, 1e-06
  %v35 = vlog2.pop %v31
  %v36 = vmul.f32 %v35, 0.6931472
  %v37 = vlog2.pop %v32
  %v38 = vmul.f32 %v37, 0.6931472
  %v39 = vlog2.pop %v33
  %v40 = vmul.f32 %v39, 0.6931472
  %v41 = vlog2.pop %v34
  %v42 = vmul.f32 %v41, 0.6931472
  %v43 = vmul.f32 %v27, %v36
  %v44 = vmul.f32 %v28, %v38
  %v45 = vmul.f32 %v29, %v40
  %v46 = vmul.f32 %v30, %v42
  %v47 = vsub.f32 1.0, %v11
  %v48 = vsub.f32 1.0, %v12
  %v49 = vsub.f32 1.0, %v13
  %v50 = vsub.f32 1.0, %v14
  %v51 = vmul.f32 %v47, 0.2
  %v52 = vmul.f32 %v48, 0.2
  %v53 = vmul.f32 %v49, 0.2
  %v54 = vmul.f32 %v50, 0.2
  %v55 = vsub.f32 1.0, %v15
  %v56 = vsub.f32 1.0, %v16
  %v57 = vsub.f32 1.0, %v17
  %v58 = vsub.f32 1.0, %v18
  %v59 = vadd.f32 %v55, 1e-06
  %v60 = vadd.f32 %v56, 1e-06
  %v61 = vadd.f32 %v57, 1e-06
  %v62 = vadd.f32 %v58, 1e-06
  %v63 = vlog2.pop %v59
  %v64 = vmul.f32 %v63, 0.6931472
  %v65 = vlog2.pop %v60
  %v66 = vmul.f32 %v65, 0.6931472
  %v67 = vlog2.pop %v61
  %v68 = vmul.f32 %v67, 0.6931472
  %v69 = vlog2.pop %v62
  %v70 = vmul.f32 %v69, 0.6931472
  %v71 = vmul.f32 %v51, %v64
  %v72 = vmul.f32 %v52, %v66
  %v73 = vmul.f32 %v53, %v68
  %v74 = vmul.f32 %v54, %v70
  %v75 = vadd.f32 %v43, %v71
  %v76 = vadd.f32 %v44, %v72
  %v77 = vadd.f32 %v45, %v73
  %v78 = vadd.f32 %v46, %v74
  %v79 = vmul.f32 %v23, %v75
  %v80 = vmul.f32 %v24, %v76
  %v81 = vmul.f32 %v25, %v77
  %v82 = vmul.f32 %v26, %v78
  %v83 = vadd.f32 %v79, %v80
  %v84 = vadd.f32 %v83, %v81
  %v85 = vadd.f32 %v84, %v82
  %86 = vst [vmem:[%s2] sm:$0xff] %v85
  // Predicated region
  $region10: #{w_crossentry.1} parent=0 // pred_check
    _
  $region11: #{w_crossentry.1} parent=0 // pred_check_branch
    %88 = sbr.rel (0) target = $region13
  $region12: #{w_crossentry.1} parent=0 // pred_region
    _
  $region13: #{w_crossentry.1} parent=0 // pred_fallthru
    _
  // Predicated region
  $region14: #{w_crossentry.1} parent=0 // pred_check
    _
  $region15: #{w_crossentry.1} parent=0 // pred_check_branch
    %90 = sbr.rel (0) target = $region17
  $region16: #{w_crossentry.1} parent=0 // pred_region
    _
  $region17: #{w_crossentry.1} parent=0 // pred_fallthru
    _

</llo_original>
